<compile_context>
chip_gen: v7x
topology: tpu7x:2x2x1
jax: 0.10.0
libtpu: 0.0.40
codegen_flags: <defaults>
</compile_context>

<pallas_src>
import functools

import jax
import jax.numpy as jnp
from jax.experimental import pallas as pl
from jax.experimental.pallas import tpu as pltpu

_LANE = 128
_BLOCK_BYTES_TARGET = 2 * 1024 * 1024  # per x block; in+out double-buffered ~= 4x this


def _stats_kernel(inv_hw, inv_hwm1, x_ref, mu_ref, var_ref):
    """Per-channel spatial mean / unbiased variance, reduced over grid axis 1.

    mu_ref / var_ref blocks keep the same block index across the HW axis, so
    they stay resident in VMEM and are used directly as running sum / sumsq
    accumulators; they are converted to (mu, var) on the last HW tile.
    """
    j = pl.program_id(1)

    @pl.when(j == 0)
    def _():
        mu_ref[...] = jnp.zeros_like(mu_ref)
        var_ref[...] = jnp.zeros_like(var_ref)

    x = x_ref[...].astype(jnp.float32)                       # (B_blk, C, HW_TILE)
    mu_ref[...] += jnp.sum(x, axis=-1, keepdims=True)        # running sum
    var_ref[...] += jnp.sum(x * x, axis=-1, keepdims=True)   # running sumsq

    @pl.when(j == pl.num_programs(1) - 1)
    def _():
        s = mu_ref[...]
        ss = var_ref[...]
        mu = s * inv_hw
        mu_ref[...] = mu
        # unbiased (ddof=1) variance; zero-padded lanes contributed 0 to both sums
        var_ref[...] = (ss - mu * s) * inv_hwm1


def _apply_kernel(x_ref, a_ref, b_ref, o_ref):
    # Per-channel affine: o = x * a + b  (a, b broadcast over the lane axis).
    o_ref[...] = (x_ref[...] * a_ref[...] + b_ref[...]).astype(o_ref.dtype)


def _pick_tiling(n, c, hw, itemsize):
    """Choose (samples per block, HW tile, padded HW) under the VMEM budget."""
    hw_full = -(-hw // _LANE) * _LANE
    one_sample_bytes = c * hw_full * itemsize
    if one_sample_bytes <= _BLOCK_BYTES_TARGET:
        hw_tile = hw_full
        b_blk = 1
        max_b = min(n, _BLOCK_BYTES_TARGET // one_sample_bytes)
        for d in range(max_b, 0, -1):          # largest divisor of N that fits
            if n % d == 0:
                b_blk = d
                break
    else:
        lanes = max(1, _BLOCK_BYTES_TARGET // (c * _LANE * itemsize))
        hw_tile = min(hw_full, lanes * _LANE)
        b_blk = 1
    hw_pad = -(-hw // hw_tile) * hw_tile
    return b_blk, hw_tile, hw_pad


def mixstyle_apply(x, lmda, perm, eps=1e-6):
    """MixStyle hot path.  x: (N, C, H, W); lmda: (N,) f32; perm: (N,) int32."""
    n, c, h, w = x.shape
    hw = h * w
    itemsize = jnp.dtype(x.dtype).itemsize
    b_blk, hw_tile, hw_pad = _pick_tiling(n, c, hw, itemsize)

    # NOTE: when C is small / not a multiple of 8, sublanes are under-filled;
    # repacking samples along sublanes would help but is a layout-only tweak.
    x3 = x.reshape(n, c, hw)
    if hw_pad != hw:
        # zero pad -> lane-dense blocks; zeros do not perturb sum / sumsq
        x3 = jnp.pad(x3, ((0, 0), (0, 0), (0, hw_pad - hw)))

    grid = (n // b_blk, hw_pad // hw_tile)
    blk_bytes = b_blk * c * hw_tile * itemsize
    vmem_limit = int(min(64 * 1024 * 1024, max(16 * 1024 * 1024, 6 * blk_bytes)))

    # ---- Pass 1: per-(sample, channel) statistics -------------------------
    stats_kernel = functools.partial(
        _stats_kernel, 1.0 / float(hw), 1.0 / float(max(hw - 1, 1)))
    mu, var = pl.pallas_call(
        stats_kernel,
        out_shape=(jax.ShapeDtypeStruct((n, c, 1), jnp.float32),
                   jax.ShapeDtypeStruct((n, c, 1), jnp.float32)),
        grid=grid,
        in_specs=[pl.BlockSpec((b_blk, c, hw_tile), lambda i, j: (i, 0, j))],
        out_specs=(pl.BlockSpec((b_blk, c, 1), lambda i, j: (i, 0, 0)),
                   pl.BlockSpec((b_blk, c, 1), lambda i, j: (i, 0, 0))),
        compiler_params=pltpu.CompilerParams(
            dimension_semantics=("parallel", "arbitrary"),
            vmem_limit_bytes=vmem_limit),
    )(x3)

    # ---- Tiny (N, C) glue math in plain JAX --------------------------------
    # Matches PyTorch's mu.detach() / sig.detach().
    mu = jax.lax.stop_gradient(mu)
    var = jax.lax.stop_gradient(var)
    sig = jnp.sqrt(var + eps)
    inv_sig = jax.lax.rsqrt(var + eps)
    lam = lmda.reshape(n, 1, 1).astype(jnp.float32)
    mu2 = mu[perm]
    sig2 = sig[perm]
    mu_mix = mu * lam + mu2 * (1.0 - lam)
    sig_mix = sig * lam + sig2 * (1.0 - lam)
    a = sig_mix * inv_sig          # scale:  sig_mix / sig
    b = mu_mix - mu * a            # shift:  mu_mix - mu * sig_mix / sig

    # ---- Pass 2: o = x * a + b ---------------------------------------------
    out = pl.pallas_call(
        _apply_kernel,
        out_shape=jax.ShapeDtypeStruct((n, c, hw_pad), x.dtype),
        grid=grid,
        in_specs=[pl.BlockSpec((b_blk, c, hw_tile), lambda i, j: (i, 0, j)),
                  pl.BlockSpec((b_blk, c, 1), lambda i, j: (i, 0, 0)),
                  pl.BlockSpec((b_blk, c, 1), lambda i, j: (i, 0, 0))],
        out_specs=pl.BlockSpec((b_blk, c, hw_tile), lambda i, j: (i, 0, j)),
        compiler_params=pltpu.CompilerParams(
            dimension_semantics=("parallel", "parallel"),
            vmem_limit_bytes=vmem_limit),
    )(x3, a, b)

    if hw_pad != hw:
        out = out[:, :, :hw]
    return out.reshape(n, c, h, w)


def mixstyle_forward(x, key, p=0.5, alpha=0.1, eps=1e-6, mix="random",
                     training=True, activated=True):
    """Full MixStyle.forward semantics.  Random sampling (gate, Beta, perm) is
    plain JAX glue; the stochastic gate uses lax.cond so the whole forward is
    trace/jit-safe (no host sync)."""
    if not training or not activated:
        return x
    n = x.shape[0]
    k_gate, k_beta, k_perm = jax.random.split(key, 3)
    gate = jax.random.uniform(k_gate)
    lmda = jax.random.beta(k_beta, alpha, alpha, (n,)).astype(jnp.float32)
    if mix == "random":
        perm = jax.random.permutation(k_perm, n).astype(jnp.int32)
    elif mix == "crossdomain":
        perm = jnp.concatenate([jnp.arange(1, n, dtype=jnp.int32),
                                jnp.zeros((1,), dtype=jnp.int32)])
    else:
        raise NotImplementedError(
            f"mix must be in ('random','crossdomain'), got {mix}")
    # PyTorch: `if torch.rand(1) > p: return x`  ->  apply iff gate <= p.
    return jax.lax.cond(gate <= p,
                        lambda t: mixstyle_apply(t, lmda, perm, eps=eps),
                        lambda t: t,
                        x)


def _mixstyle_ref(x, lmda, perm, eps=1e-6):
    """Pure-JAX reference mirroring the PyTorch forward (for validation)."""
    mu = jnp.mean(x, axis=(2, 3), keepdims=True)
    var = jnp.var(x, axis=(2, 3), keepdims=True, ddof=1)
    sig = jnp.sqrt(var + eps)
    x_normed = (x - mu) / sig
    lam = lmda.reshape(-1, 1, 1, 1)
    mu2, sig2 = mu[perm], sig[perm]
    mu_mix = mu * lam + mu2 * (1.0 - lam)
    sig_mix = sig * lam + sig2 * (1.0 - lam)
    return x_normed * sig_mix + mu_mix


if __name__ == "__main__":
    key = jax.random.PRNGKey(0)
    kx, kfwd, kb, kp = jax.random.split(key, 4)

    # small NCHW input consistent with the module: batch=2, channels=4, 16x16
    x = jax.random.normal(kx, (2, 4, 16, 16), dtype=jnp.float32)

    # deterministic lmda / perm so we can validate the kernel against the ref
    alpha, eps = 0.1, 1e-6
    lmda = jax.random.beta(kb, alpha, alpha, (x.shape[0],)).astype(jnp.float32)
    perm = jax.random.permutation(kp, x.shape[0]).astype(jnp.int32)

    out = jax.block_until_ready(mixstyle_apply(x, lmda, perm, eps=eps))
    ref = _mixstyle_ref(x, lmda, perm, eps=eps)
    assert jnp.allclose(out, ref, rtol=1e-5, atol=1e-5), "mismatch vs reference"

    # full forward path (gate + Beta + perm sampled inside); p=1.0 so it applies
    out_full = jax.block_until_ready(
        mixstyle_forward(x, kfwd, p=1.0, alpha=alpha, eps=eps, mix="random"))
    assert out_full.shape == x.shape

    # TODO(synk): if a backward pass is ever needed, add a custom VJP keeping
    # the statistics stop_gradient'ed (PyTorch detaches mu/sig).
    print("KERNEL_OK")
</pallas_src>

<mosaic_0001>
module attributes {stable_mosaic.version = 11 : i64} {
  func.func @_stats_kernel(%arg0: i32, %arg1: i32, %arg2: memref<2x4x256xf32, #tpu.memory_space<vmem>>, %arg3: memref<2x4x1xf32, #tpu.memory_space<vmem>>, %arg4: memref<2x4x1xf32, #tpu.memory_space<vmem>>) attributes {dimension_semantics = [#tpu.dimension_semantics<parallel>, #tpu.dimension_semantics<arbitrary>], iteration_bounds = array<i64: 1, 1>, scalar_prefetch = 0 : i64, scratch_operands = 0 : i64, tpu.core_type = #tpu.core_type<tc>, window_params = [{transform_indices = @transform_0, window_bounds = array<i64: 2, 4, 256>}, {transform_indices = @transform_1, window_bounds = array<i64: 2, 4, 1>}, {transform_indices = @transform_2, window_bounds = array<i64: 2, 4, 1>}]} {
    %c0_i32 = arith.constant 0 : i32
    %0 = arith.cmpi eq, %arg1, %c0_i32 : i32
    %1 = arith.extui %0 : i1 to i32
    %c0_i32_0 = arith.constant 0 : i32
    %2 = arith.cmpi ne, %1, %c0_i32_0 : i32
    scf.if %2 {
      %cst_18 = arith.constant 0.000000e+00 : f32
      %18 = vector.broadcast %cst_18 : f32 to vector<2x4x1xf32>
      %c0_19 = arith.constant 0 : index
      %c0_20 = arith.constant 0 : index
      %c0_21 = arith.constant 0 : index
      %19 = vector.load %arg3[%c0_19, %c0_20, %c0_21] : memref<2x4x1xf32, #tpu.memory_space<vmem>>, vector<2x4x1xf32>
      tpu.vector_store %arg3[%c0_19, %c0_20, %c0_21], %18 {strides = array<i32>} : memref<2x4x1xf32, #tpu.memory_space<vmem>>, vector<2x4x1xf32>,
      %cst_22 = arith.constant 0.000000e+00 : f32
      %20 = vector.broadcast %cst_22 : f32 to vector<2x4x1xf32>
      %c0_23 = arith.constant 0 : index
      %c0_24 = arith.constant 0 : index
      %c0_25 = arith.constant 0 : index
      %21 = vector.load %arg4[%c0_23, %c0_24, %c0_25] : memref<2x4x1xf32, #tpu.memory_space<vmem>>, vector<2x4x1xf32>
      tpu.vector_store %arg4[%c0_23, %c0_24, %c0_25], %20 {strides = array<i32>} : memref<2x4x1xf32, #tpu.memory_space<vmem>>, vector<2x4x1xf32>,
    } else {
    }
    %c0 = arith.constant 0 : index
    %c0_1 = arith.constant 0 : index
    %c0_2 = arith.constant 0 : index
    %3 = vector.load %arg2[%c0, %c0_1, %c0_2] : memref<2x4x256xf32, #tpu.memory_space<vmem>>, vector<2x4x256xf32>
    %c0_3 = arith.constant 0 : index
    %c0_4 = arith.constant 0 : index
    %c0_5 = arith.constant 0 : index
    %4 = vector.load %arg3[%c0_3, %c0_4, %c0_5] : memref<2x4x1xf32, #tpu.memory_space<vmem>>, vector<2x4x1xf32>
    %cst = arith.constant dense<0.000000e+00> : vector<2x4xf32>
    %5 = vector.multi_reduction <add>, %3, %cst [2] : vector<2x4x256xf32> to vector<2x4xf32>
    %6 = vector.shape_cast %5 : vector<2x4xf32> to vector<2x4x1xf32>
    %7 = arith.addf %4, %6 : vector<2x4x1xf32>
    %c0_6 = arith.constant 0 : index
    %c0_7 = arith.constant 0 : index
    %c0_8 = arith.constant 0 : index
    %8 = vector.load %arg3[%c0_6, %c0_7, %c0_8] : memref<2x4x1xf32, #tpu.memory_space<vmem>>, vector<2x4x1xf32>
    tpu.vector_store %arg3[%c0_6, %c0_7, %c0_8], %7 {strides = array<i32>} : memref<2x4x1xf32, #tpu.memory_space<vmem>>, vector<2x4x1xf32>,
    %c0_9 = arith.constant 0 : index
    %c0_10 = arith.constant 0 : index
    %c0_11 = arith.constant 0 : index
    %9 = vector.load %arg4[%c0_9, %c0_10, %c0_11] : memref<2x4x1xf32, #tpu.memory_space<vmem>>, vector<2x4x1xf32>
    %10 = arith.mulf %3, %3 : vector<2x4x256xf32>
    %cst_12 = arith.constant dense<0.000000e+00> : vector<2x4xf32>
    %11 = vector.multi_reduction <add>, %10, %cst_12 [2] : vector<2x4x256xf32> to vector<2x4xf32>
    %12 = vector.shape_cast %11 : vector<2x4xf32> to vector<2x4x1xf32>
    %13 = arith.addf %9, %12 : vector<2x4x1xf32>
    %c0_13 = arith.constant 0 : index
    %c0_14 = arith.constant 0 : index
    %c0_15 = arith.constant 0 : index
    %14 = vector.load %arg4[%c0_13, %c0_14, %c0_15] : memref<2x4x1xf32, #tpu.memory_space<vmem>>, vector<2x4x1xf32>
    tpu.vector_store %arg4[%c0_13, %c0_14, %c0_15], %13 {strides = array<i32>} : memref<2x4x1xf32, #tpu.memory_space<vmem>>, vector<2x4x1xf32>,
    %c0_i32_16 = arith.constant 0 : i32
    %15 = arith.cmpi eq, %arg1, %c0_i32_16 : i32
    %16 = arith.extui %15 : i1 to i32
    %c0_i32_17 = arith.constant 0 : i32
    %17 = arith.cmpi ne, %16, %c0_i32_17 : i32
    scf.if %17 {
      %c0_18 = arith.constant 0 : index
      %c0_19 = arith.constant 0 : index
      %c0_20 = arith.constant 0 : index
      %18 = vector.load %arg3[%c0_18, %c0_19, %c0_20] : memref<2x4x1xf32, #tpu.memory_space<vmem>>, vector<2x4x1xf32>
      %c0_21 = arith.constant 0 : index
      %c0_22 = arith.constant 0 : index
      %c0_23 = arith.constant 0 : index
      %19 = vector.load %arg4[%c0_21, %c0_22, %c0_23] : memref<2x4x1xf32, #tpu.memory_space<vmem>>, vector<2x4x1xf32>
      %cst_24 = arith.constant 3.906250e-03 : f32
      %20 = vector.broadcast %cst_24 : f32 to vector<2x4x1xf32>
      %21 = arith.mulf %18, %20 : vector<2x4x1xf32>
      %c0_25 = arith.constant 0 : index
      %c0_26 = arith.constant 0 : index
      %c0_27 = arith.constant 0 : index
      %22 = vector.load %arg3[%c0_25, %c0_26, %c0_27] : memref<2x4x1xf32, #tpu.memory_space<vmem>>, vector<2x4x1xf32>
      tpu.vector_store %arg3[%c0_25, %c0_26, %c0_27], %21 {strides = array<i32>} : memref<2x4x1xf32, #tpu.memory_space<vmem>>, vector<2x4x1xf32>,
      %23 = arith.mulf %21, %18 : vector<2x4x1xf32>
      %24 = arith.subf %19, %23 : vector<2x4x1xf32>
      %cst_28 = arith.constant 0.00392156886 : f32
      %25 = vector.broadcast %cst_28 : f32 to vector<2x4x1xf32>
      %26 = arith.mulf %24, %25 : vector<2x4x1xf32>
      %c0_29 = arith.constant 0 : index
      %c0_30 = arith.constant 0 : index
      %c0_31 = arith.constant 0 : index
      %27 = vector.load %arg4[%c0_29, %c0_30, %c0_31] : memref<2x4x1xf32, #tpu.memory_space<vmem>>, vector<2x4x1xf32>
      tpu.vector_store %arg4[%c0_29, %c0_30, %c0_31], %26 {strides = array<i32>} : memref<2x4x1xf32, #tpu.memory_space<vmem>>, vector<2x4x1xf32>,
    } else {
    }
    return
  }
  func.func @transform_0(%arg0: i32, %arg1: i32) -> (i32, i32, i32) {
    %c0_i32 = arith.constant 0 : i32
    %c0_i32_0 = arith.constant 0 : i32
    return %arg0, %c0_i32, %arg1 : i32, i32, i32
  }
  func.func @transform_1(%arg0: i32, %arg1: i32) -> (i32, i32, i32) {
    %c0_i32 = arith.constant 0 : i32
    %c0_i32_0 = arith.constant 0 : i32
    %c0_i32_1 = arith.constant 0 : i32
    return %arg0, %c0_i32, %c0_i32_0 : i32, i32, i32
  }
  func.func @transform_2(%arg0: i32, %arg1: i32) -> (i32, i32, i32) {
    %c0_i32 = arith.constant 0 : i32
    %c0_i32_0 = arith.constant 0 : i32
    %c0_i32_1 = arith.constant 0 : i32
    return %arg0, %c0_i32, %c0_i32_0 : i32, i32, i32
  }
}

</mosaic_0001>

<llo_original>
// kernel: tpu_custom_call.1
$region0: #{tpu_custom_call.1}
  #allocation0 [shape = 'u32[]', space=smem, size = 0x4, offset = 0x4, fixed_abs, tag = 'smem constant byte address 0x4 - core index']
  #allocation1 [shape = 'u32[144,128]{1,0:T(1,128)}', space=vmem, size = 0x12000, scoped, tag = 'internal scratch']
  %s0 = inlined_call_operand.hbm [shape: f32[2,4,256], index: 0, kind: input, shape index: {}]
  %s1 = inlined_call_operand.vmem [shape: f32[2,4,1], index: 1, kind: output, shape index: {0}]
  %s2 = inlined_call_operand.vmem [shape: f32[2,4,1], index: 2, kind: output, shape index: {1}]
  %3 = xla_tuple %s1, %s2
  %s4 = sld [smem:[#allocation0]]
  $region34: #{tpu_custom_call.1} parent=0
    _
  %s6 = ssub.s32 1, %s4
  %s7 = scalar_select 0, %s6, %s4
  $region1: #{tpu_custom_call.1} parent=0
    #allocation2 [shape = 'u8[8192]{0}', space=vmem, size = 0x2000, scoped, tag = 'input window, operand 0, single buffered']
    #allocation3 [shape = 's32[1]{0}', space=sflag, size = 0x4, scoped, tag = 'scoped memory for tpu_custom_call.1']
    %8 = vsyncpa [#allocation3], 0
    // Predicated region
    $region2: #{tpu_custom_call.1} parent=1 // pred_check
      _
    $region3: #{tpu_custom_call.1} parent=1 // pred_check_branch
      %10 = sbr.rel (0) target = $region5
    $region4: #{tpu_custom_call.1} parent=1 // pred_region
      %s12 = ssub.s32 256, 256
      %13 = vsyncadd [#allocation3], %s12
      %s14 = sshll.u32 [#allocation2], 4
      %s15 = int_to_ptr.vmem [resolvable:$true] %s14
      %20 = dma.hbm_to_vmem [thread:$0]  %s0, 256, %s15, [#allocation3], 128, 128, 8
    $region5: #{tpu_custom_call.1} parent=1 // pred_fallthru
      _
    // Predicated region
    $region6: #{tpu_custom_call.1} parent=1 // pred_check
      _
    $region7: #{tpu_custom_call.1} parent=1 // pred_check_branch
      %22 = sbr.rel (0) target = $region9
    $region8: #{tpu_custom_call.1} parent=1 // pred_region
      %23 = dma.done [#allocation3], 256
    $region9: #{tpu_custom_call.1} parent=1 // pred_fallthru
      _
    %p24 = scmp.eq.s32.totalorder 0, 0
    // Predicated region
    $region10: #{tpu_custom_call.1} parent=1 // pred_check
      %p25 = pneg %p24
    $region11: #{tpu_custom_call.1} parent=1 // pred_check_branch
      %27 = sbr.rel (%p25) target = $region13
    $region12: #{tpu_custom_call.1} parent=1 // pred_region
      %vm28 = vcmask 3072
      %29 = vst.msk [vmem:[%s1] sm:$0xf] %vm28, 0.0
      %30 = vst.msk [vmem:[%s1 + $0x4] sm:$0xf] %vm28, 0.0
      %31 = vst.msk [vmem:[%s2] sm:$0xf] %vm28, 0.0
      %32 = vst.msk [vmem:[%s2 + $0x4] sm:$0xf] %vm28, 0.0
    $region13: #{tpu_custom_call.1} parent=1 // pred_fallthru
      _
    %v33 = vld [vmem:[#allocation2] sm:$0xff]
    %v34 = vld [vmem:[#allocation2 + $0x8] sm:$0xff]
    %v35 = vld [vmem:[%s1] sm:$0xf]
    %v36 = vld [vmem:[%s1 + $0x4] sm:$0xf]
    %v39 = vcombine.high %v33, %v33
    %v40 = vcombine.high %v34, %v34
    %vm43 = vcmask 1043456
    %v44 = vsel %vm43, %v33, 0.0
    %v45 = vsel %vm43, %v39, 0.0
    %v46 = vadd.f32 %v44, %v45
    %47 = vadd.xlane.f32.xlu0 %v46
    %v48 = vpop.xlane.xlu0 %47
    %v49 = vsel %vm43, %v34, 0.0
    %v50 = vsel %vm43, %v40, 0.0
    %v51 = vadd.f32 %v49, %v50
    %52 = vadd.xlane.f32.xlu0 %v51
    %v53 = vpop.xlane.xlu0 %52
    %v54 = vadd.f32 %v35, %v48
    %v55 = vadd.f32 %v36, %v53
    %vm56 = vcmask 3072
    %57 = vst.msk [vmem:[%s1] sm:$0xf] %vm56, %v54
    %58 = vst.msk [vmem:[%s1 + $0x4] sm:$0xf] %vm56, %v55
    %v59 = vld [vmem:[%s2] sm:$0xf]
    %v60 = vld [vmem:[%s2 + $0x4] sm:$0xf]
    %v61 = vmul.f32 %v33, %v33
    %v62 = vmul.f32 %v34, %v34
    %v65 = vcombine.high %v61, %v61
    %v66 = vcombine.high %v62, %v62
    %v69 = vsel %vm43, %v61, 0.0
    %v70 = vsel %vm43, %v65, 0.0
    %v71 = vadd.f32 %v69, %v70
    %72 = vadd.xlane.f32.xlu0 %v71
    %v73 = vpop.xlane.xlu0 %72
    %v74 = vsel %vm43, %v62, 0.0
    %v75 = vsel %vm43, %v66, 0.0
    %v76 = vadd.f32 %v74, %v75
    %77 = vadd.xlane.f32.xlu0 %v76
    %v78 = vpop.xlane.xlu0 %77
    %v79 = vadd.f32 %v59, %v73
    %v80 = vadd.f32 %v60, %v78
    %81 = vst.msk [vmem:[%s2] sm:$0xf] %vm56, %v79
    %82 = vst.msk [vmem:[%s2 + $0x4] sm:$0xf] %vm56, %v80
    // Predicated region
    $region14: #{tpu_custom_call.1} parent=1 // pred_check
      %p83 = pneg %p24
    $region15: #{tpu_custom_call.1} parent=1 // pred_check_branch
      %85 = sbr.rel (%p83) target = $region17
    $region16: #{tpu_custom_call.1} parent=1 // pred_region
      %v86 = vld [vmem:[%s1] sm:$0xf]
      %v87 = vld [vmem:[%s1 + $0x4] sm:$0xf]
      %v88 = vld [vmem:[%s2] sm:$0xf]
      %v89 = vld [vmem:[%s2 + $0x4] sm:$0xf]
      %v90 = vmul.f32 %v86, 0.00390625
      %v91 = vmul.f32 %v87, 0.00390625
      %92 = vst.msk [vmem:[%s1] sm:$0xf] %vm56, %v90
      %93 = vst.msk [vmem:[%s1 + $0x4] sm:$0xf] %vm56, %v91
      %v94 = vmul.f32 %v90, %v86
      %v95 = vmul.f32 %v91, %v87
      %v96 = vsub.f32 %v88, %v94
      %v97 = vsub.f32 %v89, %v95
      %v98 = vmul.f32 %v96, 0.003921569
      %v99 = vmul.f32 %v97, 0.003921569
      %100 = vst.msk [vmem:[%s2] sm:$0xf] %vm56, %v98
      %101 = vst.msk [vmem:[%s2 + $0x4] sm:$0xf] %vm56, %v99
    $region17: #{tpu_custom_call.1} parent=1 // pred_fallthru
      _
    // Predicated region
    $region18: #{tpu_custom_call.1} parent=1 // pred_check
      _
    $region19: #{tpu_custom_call.1} parent=1 // pred_check_branch
      %103 = sbr.rel (0) target = $region21
    $region20: #{tpu_custom_call.1} parent=1 // pred_region
      _
    $region21: #{tpu_custom_call.1} parent=1 // pred_fallthru
      _
    // Predicated region
    $region22: #{tpu_custom_call.1} parent=1 // pred_check
      _
    $region23: #{tpu_custom_call.1} parent=1 // pred_check_branch
      %105 = sbr.rel (0) target = $region25
    $region24: #{tpu_custom_call.1} parent=1 // pred_region
      _
    $region25: #{tpu_custom_call.1} parent=1 // pred_fallthru
      _
    // Predicated region
    $region26: #{tpu_custom_call.1} parent=1 // pred_check
      _
    $region27: #{tpu_custom_call.1} parent=1 // pred_check_branch
      %107 = sbr.rel (0) target = $region29
    $region28: #{tpu_custom_call.1} parent=1 // pred_region
      _
    $region29: #{tpu_custom_call.1} parent=1 // pred_fallthru
      _
    // Predicated region
    $region30: #{tpu_custom_call.1} parent=1 // pred_check
      _
    $region31: #{tpu_custom_call.1} parent=1 // pred_check_branch
      %109 = sbr.rel (0) target = $region33
    $region32: #{tpu_custom_call.1} parent=1 // pred_region
      _
    $region33: #{tpu_custom_call.1} parent=1 // pred_fallthru
      _
    %110 = vsyncpa [#allocation3], 1

</llo_original>
